<compile_context>
chip_gen: v5e
topology: v5e:2x2
jax: 0.10.0
libtpu: 0.0.40
codegen_flags: <defaults>
</compile_context>

<pallas_src>
import jax
import jax.numpy as jnp
from jax import lax
from jax.experimental import pallas as pl
from jax.experimental.pallas import tpu as pltpu  # noqa: F401  (TPU backend)

MAX_VAL_PARAMS = {
    'abm-covid': [8.0, 0.02, 1.0],
    'abm-flu': [2.6, 5.0],
    'seirm': [1.0, 1.0, 1.0, 1.0, 1.0],
    'sirs': [1.0, 5.0],
}
MIN_VAL_PARAMS = {
    'abm-covid': [1.0, 0.001, 0.01],
    'abm-flu': [1.05, 0.1],
    'seirm': [0.0, 0.0, 0.0, 0.0, 0.01],
    'sirs': [0.0, 0.1],
}

LANE = 128


def _make_bound_kernel(lo_list, span_list, p_pad):
    """Build a kernel with the (lo, span) bounds baked in as constants.

    out = lo + span * sigmoid(params), elementwise over a (1, p_pad) row.
    """
    lo_list = tuple(float(v) for v in lo_list)
    span_list = tuple(float(v) for v in span_list)

    def kernel(params_ref, out_ref):
        p = params_ref[...]

        # Materialize the per-lane (lo, span) constant rows from scalar
        # literals: a handful of lane-index selects (P <= 5).  Padded lanes
        # get lo = span = 0 and are sliced off by the wrapper.
        lane = lax.broadcasted_iota(jnp.int32, (1, p_pad), 1)
        lo = jnp.zeros((1, p_pad), jnp.float32)
        span = jnp.zeros((1, p_pad), jnp.float32)
        for i in range(len(lo_list)):
            sel = lane == i
            lo = jnp.where(sel, jnp.float32(lo_list[i]), lo)
            span = jnp.where(sel, jnp.float32(span_list[i]), span)

        # sigmoid(p) = 1 / (1 + exp(-p)); exp and the reciprocal both run on
        # the EUP slot (reciprocal is exact -> keeps 1e-6-level accuracy).
        sig = pl.reciprocal(1.0 + jnp.exp(-p), approx=False)
        out_ref[...] = lo + span * sig

    return kernel


def learnable_params_forward(learnable_params, scale_output='abm-covid'):
    """JAX/Pallas equivalent of LearnableParams.forward().

    Args:
      learnable_params: (P,) float32 raw (unbounded) parameters.
      scale_output: key into MIN_VAL_PARAMS / MAX_VAL_PARAMS.
    Returns:
      (P,) float32 bounded parameters.
    """
    lo_list = MIN_VAL_PARAMS[scale_output]
    hi_list = MAX_VAL_PARAMS[scale_output]
    span_list = [hi - lo for lo, hi in zip(lo_list, hi_list)]

    p = learnable_params.shape[0]
    assert p == len(lo_list), "num_params must match the scale_output bounds"
    p_pad = ((p + LANE - 1) // LANE) * LANE

    params2d = jnp.pad(
        learnable_params.astype(jnp.float32).reshape(1, p),
        ((0, 0), (0, p_pad - p)),
    )

    out = pl.pallas_call(
        _make_bound_kernel(lo_list, span_list, p_pad),
        out_shape=jax.ShapeDtypeStruct((1, p_pad), jnp.float32),
        in_specs=[pl.BlockSpec((1, p_pad), lambda: (0, 0))],
        out_specs=pl.BlockSpec((1, p_pad), lambda: (0, 0)),
    )(params2d)

    return out[0, :p]


if __name__ == "__main__":
    scale_output = 'abm-covid'
    num_params = len(MIN_VAL_PARAMS[scale_output])  # 3

    # Deterministic init mimicking torch.rand(num_params) in __init__.
    key = jax.random.PRNGKey(0)
    learnable_params = jax.random.uniform(
        key, (num_params,), dtype=jnp.float32, minval=0.0, maxval=1.0)

    out = learnable_params_forward(learnable_params, scale_output)
    out = jax.block_until_ready(out)

    # Reference check in plain JAX.
    min_values = jnp.asarray(MIN_VAL_PARAMS[scale_output], dtype=jnp.float32)
    max_values = jnp.asarray(MAX_VAL_PARAMS[scale_output], dtype=jnp.float32)
    ref = min_values + (max_values - min_values) * jax.nn.sigmoid(learnable_params)

    assert out.shape == (num_params,)
    assert jnp.allclose(out, ref, atol=1e-5, rtol=1e-5), (out, ref)

    print("KERNEL_OK")
</pallas_src>

<mosaic_0001>
module attributes {stable_mosaic.version = 11 : i64} {
  func.func @kernel(%arg0: memref<1x128xf32, #tpu.memory_space<vmem>>, %arg1: memref<1x128xf32, #tpu.memory_space<vmem>>) attributes {dimension_semantics = [], scalar_prefetch = 0 : i64, scratch_operands = 0 : i64, tpu.core_type = #tpu.core_type<tc>} {
    %c0 = arith.constant 0 : index
    %c0_0 = arith.constant 0 : index
    %0 = vector.load %arg0[%c0, %c0_0] : memref<1x128xf32, #tpu.memory_space<vmem>>, vector<1x128xf32>
    %1 = tpu.iota {dimensions = array<i32: 1>} : vector<1x128xi32>
    %cst = arith.constant 0.000000e+00 : f32
    %2 = vector.broadcast %cst : f32 to vector<1x128xf32>
    %cst_1 = arith.constant 0.000000e+00 : f32
    %3 = vector.broadcast %cst_1 : f32 to vector<1x128xf32>
    %c0_i32 = arith.constant 0 : i32
    %4 = vector.broadcast %c0_i32 : i32 to vector<1x128xi32>
    %5 = arith.cmpi eq, %1, %4 : vector<1x128xi32>
    %cst_2 = arith.constant 1.000000e+00 : f32
    %6 = vector.broadcast %cst_2 : f32 to vector<1x128xf32>
    %7 = arith.select %5, %6, %2 : vector<1x128xi1>, vector<1x128xf32>
    %cst_3 = arith.constant 7.000000e+00 : f32
    %8 = vector.broadcast %cst_3 : f32 to vector<1x128xf32>
    %9 = arith.select %5, %8, %3 : vector<1x128xi1>, vector<1x128xf32>
    %c1_i32 = arith.constant 1 : i32
    %10 = vector.broadcast %c1_i32 : i32 to vector<1x128xi32>
    %11 = arith.cmpi eq, %1, %10 : vector<1x128xi32>
    %cst_4 = arith.constant 1.000000e-03 : f32
    %12 = vector.broadcast %cst_4 : f32 to vector<1x128xf32>
    %13 = arith.select %11, %12, %7 : vector<1x128xi1>, vector<1x128xf32>
    %cst_5 = arith.constant 1.900000e-02 : f32
    %14 = vector.broadcast %cst_5 : f32 to vector<1x128xf32>
    %15 = arith.select %11, %14, %9 : vector<1x128xi1>, vector<1x128xf32>
    %c2_i32 = arith.constant 2 : i32
    %16 = vector.broadcast %c2_i32 : i32 to vector<1x128xi32>
    %17 = arith.cmpi eq, %1, %16 : vector<1x128xi32>
    %cst_6 = arith.constant 0.00999999977 : f32
    %18 = vector.broadcast %cst_6 : f32 to vector<1x128xf32>
    %19 = arith.select %17, %18, %13 : vector<1x128xi1>, vector<1x128xf32>
    %cst_7 = arith.constant 9.900000e-01 : f32
    %20 = vector.broadcast %cst_7 : f32 to vector<1x128xf32>
    %21 = arith.select %17, %20, %15 : vector<1x128xi1>, vector<1x128xf32>
    %cst_8 = arith.constant 0.000000e+00 : f32
    %22 = vector.broadcast %cst_8 : f32 to vector<1x128xf32>
    %23 = arith.subf %22, %0 : vector<1x128xf32>
    %24 = math.exp %23 : vector<1x128xf32>
    %cst_9 = arith.constant 1.000000e+00 : f32
    %25 = vector.broadcast %cst_9 : f32 to vector<1x128xf32>
    %26 = arith.addf %25, %24 : vector<1x128xf32>
    %27 = tpu.reciprocal %26 : vector<1x128xf32> -> vector<1x128xf32>
    %28 = arith.mulf %21, %27 : vector<1x128xf32>
    %29 = arith.addf %19, %28 : vector<1x128xf32>
    %c0_10 = arith.constant 0 : index
    %c0_11 = arith.constant 0 : index
    %30 = vector.load %arg1[%c0_10, %c0_11] : memref<1x128xf32, #tpu.memory_space<vmem>>, vector<1x128xf32>
    tpu.vector_store %arg1[%c0_10, %c0_11], %29 {strides = array<i32>} : memref<1x128xf32, #tpu.memory_space<vmem>>, vector<1x128xf32>,
    return
  }
}

</mosaic_0001>

<llo_original>
// kernel: tpu_custom_call.1
$region0: #{tpu_custom_call.1}
  #allocation0 [shape = 'u32[]', space=smem, size = 0x4, offset = 0x4, fixed_abs, tag = 'smem constant byte address 0x4 - core index']
  #allocation1 [shape = 'u32[72,128]{1,0:T(1,128)}', space=vmem, size = 0x9000, scoped, tag = 'internal scratch']
  %s0 = inlined_call_operand.hbm [shape: f32[1,128], index: 0, kind: input, shape index: {}]
  %s1 = inlined_call_operand.hbm [shape: f32[1,128], index: 1, kind: output, shape index: {}]
  %s2 = sld [smem:[#allocation0]]
  $region18: #{tpu_custom_call.1} parent=0
    _
  %s4 = ssub.s32 1, %s2
  %s5 = scalar_select 0, %s4, %s2
  $region1: #{tpu_custom_call.1} parent=0
    #allocation2 [shape = 'u8[512]{0}', space=vmem, size = 0x400, scoped, tag = 'input window, operand 0, single buffered']
    #allocation3 [shape = 's32[1]{0}', space=sflag, size = 0x4, scoped, tag = 'scoped memory for tpu_custom_call.1']
    #allocation4 [shape = 's32[1]{0}', space=sflag, size = 0x4, scoped, tag = 'scoped memory for tpu_custom_call.1']
    #allocation5 [shape = 'u8[512]{0}', space=vmem, size = 0x400, scoped, tag = 'output window, operand 0, single buffered']
    %6 = vsyncpa [#allocation3], 0
    %7 = vsyncpa [#allocation4], 0
    // Predicated region
    $region2: #{tpu_custom_call.1} parent=1 // pred_check
      _
    $region3: #{tpu_custom_call.1} parent=1 // pred_check_branch
      %9 = sbr.rel (0) target = $region5
    $region4: #{tpu_custom_call.1} parent=1 // pred_region
      %11 = vsyncadd [#allocation3], 0
      %s13 = sshll.u32 %s0, 4
      %s14 = int_to_ptr.hbm [resolvable:$true] %s13
      %s15 = sshll.u32 [#allocation2], 4
      %s16 = int_to_ptr.vmem [resolvable:$true] %s15
      %18 = dma.hbm_to_vmem [thread:$0]  %s14, 16, %s16, [#allocation3]
    $region5: #{tpu_custom_call.1} parent=1 // pred_fallthru
      _
    // Predicated region
    $region6: #{tpu_custom_call.1} parent=1 // pred_check
      _
    $region7: #{tpu_custom_call.1} parent=1 // pred_check_branch
      %20 = sbr.rel (0) target = $region9
    $region8: #{tpu_custom_call.1} parent=1 // pred_region
      %22 = dma.done [#allocation3], 16
    $region9: #{tpu_custom_call.1} parent=1 // pred_fallthru
      _
    %v23 = vld [vmem:[#allocation2] sm:$0x1]
    %v24 = vlaneseq
    %v25 = vand.u32 %v24, 127
    %vm26 = vcmp.eq.s32.totalorder %v25, 0
    %v27 = vsel %vm26, 1.0, 0.0
    %v28 = vsel %vm26, 7.0, 0.0
    %vm29 = vcmp.eq.s32.totalorder %v25, 1
    %v30 = vsel %vm29, 0.001, %v27
    %v31 = vsel %vm29, 0.019, %v28
    %vm32 = vcmp.eq.s32.totalorder %v25, 2
    %v33 = vsel %vm32, 0.01, %v30
    %v34 = vsel %vm32, 0.99, %v31
    %v35 = vsub.f32 0.0, %v23
    %v36 = vmul.f32 %v35, 1.442695
    %v37 = vpow.pop %v36
    %v38 = vadd.f32 %v37, 1.0
    %v39 = vrcp.pop %v38
    %v40 = vmul.f32 %v38, %v39
    %v41 = vsub.f32 1.0, %v40
    %v42 = vmul.f32 %v39, %v41
    %v43 = vadd.f32 %v39, %v42
    %vm44 = vweird.f32 %v38
    %vm45 = vweird.f32 %v39
    %vm46 = vmor %vm44, %vm45
    %v47 = vsel %vm46, %v39, %v43
    %v48 = vand.u32 2147483647, %v38
    %vm49 = vcmp.eq.f32.partialorder %v48, 8.507059e+37
    %v50 = vand.u32 %v38, 2147483648
    %v51 = vor.u32 1.1754944e-38, %v50
    %v52 = vsel %vm49, %v51, %v47
    %v53 = vmul.f32 %v34, %v52
    %v54 = vadd.f32 %v33, %v53
    %55 = vst [vmem:[#allocation5] sm:$0x1] %v54
    // Predicated region
    $region10: #{tpu_custom_call.1} parent=1 // pred_check
      _
    $region11: #{tpu_custom_call.1} parent=1 // pred_check_branch
      %57 = sbr.rel (0) target = $region13
    $region12: #{tpu_custom_call.1} parent=1 // pred_region
      %59 = vsyncadd [#allocation4], 0
      %s61 = sshll.u32 [#allocation5], 4
      %s62 = int_to_ptr.vmem [resolvable:$true] %s61
      %s63 = sshll.u32 %s1, 4
      %s64 = int_to_ptr.hbm [resolvable:$true] %s63
      %66 = dma.vmem_to_hbm [thread:$0]  %s62, 16, %s64, [#allocation4]
    $region13: #{tpu_custom_call.1} parent=1 // pred_fallthru
      _
    // Predicated region
    $region14: #{tpu_custom_call.1} parent=1 // pred_check
      _
    $region15: #{tpu_custom_call.1} parent=1 // pred_check_branch
      %68 = sbr.rel (0) target = $region17
    $region16: #{tpu_custom_call.1} parent=1 // pred_region
      %70 = dma.done [#allocation4], 16
    $region17: #{tpu_custom_call.1} parent=1 // pred_fallthru
      _
    %71 = vsyncpa [#allocation3], 1
    %72 = vsyncpa [#allocation4], 1

</llo_original>
